<compile_context>
chip_gen: v7x
topology: tpu7x:2x2x1
jax: 0.10.0
libtpu: 0.0.40
codegen_flags: <defaults>
</compile_context>

<pallas_src>
import jax
import jax.numpy as jnp
import numpy as np
from jax import lax
from jax.experimental import pallas as pl
from jax.experimental.pallas import tpu as pltpu

KH = KW = 3
CIN = 3
COUT = 64
K_TAPS = KH * KW * CIN  # 27


# ----------------------------- kernel ---------------------------------------


def convchain_kernel(xc_ref, w_ref, b_ref, o_ref):
    """Conv (im2col matmul) + 2x2 max-pool + bias + ReLU for one (batch,row) block.

    xc_ref : (B_blk, rb*4*Wo, 27) bf16 im2col patches, rows ordered (i, 2p+q, j)
             with h = 2i + p, w = 2j + q
    w_ref  : (27, COUT)           bf16 conv weights, row = (ky*KW + kx)*CIN + c
    b_ref  : (1, COUT)            f32 bias
    o_ref  : (B_blk, rb, Wo, COUT) f32 pooled output
    """
    B, rows, K = xc_ref.shape
    _, rb, Wo, cout = o_ref.shape

    # One MXU matmul per grid step: bf16 x bf16 -> f32 accumulation.
    # (reshape is a leading/sublane merge only; free when rows % 16 == 0)
    xc = xc_ref[...].reshape(B * rows, K)
    acc = jnp.dot(xc, w_ref[...], preferred_element_type=jnp.float32)  # (B*rows, 64)

    # 2x2 max-pool FIRST (exact: maxpool(relu(x+b)) == relu(maxpool(x)+b)).
    # Row ordering puts the 4 window pixels on a leading axis -> 3 vreg maxima.
    # (sublane-split reshape; free when Wo % 8 == 0, correctness unaffected)
    r = acc.reshape(B * rb, 4, Wo, cout)
    pooled = jnp.maximum(jnp.maximum(r[:, 0], r[:, 1]),
                         jnp.maximum(r[:, 2], r[:, 3]))                # (B*rb, Wo, 64)

    # Bias + ReLU on the 4x-smaller pooled tensor (f32, VPU).
    pooled = jnp.maximum(pooled + b_ref[...], 0.0)

    o_ref[...] = pooled.reshape(B, rb, Wo, cout).astype(o_ref.dtype)


# ----------------------------- sizing helpers --------------------------------


def _round_up(a, b):
    return -(-a // b) * b


def _vmem_bytes(bb, rb, Wo):
    """Per-grid-step VMEM estimate, including (sublane,lane) tile padding."""
    rows_in = rb * 4 * Wo
    in_t = bb * _round_up(rows_in, 16) * 128 * 2          # bf16 xc tile (27 -> 128 lanes)
    out_t = bb * rb * _round_up(Wo, 8) * 128 * 4          # f32 out tile (64 -> 128 lanes)
    acc = bb * _round_up(rows_in, 8) * 128 * 4            # live f32 acc value
    fixed = 2 * _round_up(K_TAPS, 16) * 128 * 2 + 2 * 8 * 128 * 4 + (1 << 20)
    return 2 * in_t + 2 * out_t + acc + fixed             # inputs/outputs double-buffered


def _vmem_capacity_bytes():
    try:
        return int(pltpu.get_tpu_info().vmem_capacity_bytes)
    except Exception:
        pass
    try:
        kind = jax.devices()[0].device_kind.lower()
    except Exception:
        kind = ""
    return (64 << 20) if ("v7" in kind or "7x" in kind) else (128 << 20)


def _num_tensorcores():
    """TensorCores addressable by the 'parallel' grid axes on one chip."""
    try:
        kind = jax.devices()[0].device_kind.lower()
    except Exception:
        return 1
    if any(tag in kind for tag in ("v7", "7x", "v4", "v5p")):
        return 2
    return 1   # v5e / v6e: single TC, grid is a serial loop


def _choose_blocks(N, Ho, Wo, budget, num_cores):
    # Row-block candidates: divisors of Ho (descending).  If rb < Ho, the input
    # block's sublane dim (rb*4*Wo) must be a multiple of 8 (BlockSpec rule).
    row_divs = [d for d in range(Ho, 0, -1) if Ho % d == 0]
    row_divs = [d for d in row_divs if d == Ho or (d * 4 * Wo) % 8 == 0] or [Ho]

    # Largest work-per-step that fits the VMEM budget (fewest grid steps).
    best_bb, best_rb, best_work = 1, row_divs[-1], -1
    for bb in range(1, min(N, 8) + 1):
        for rb in row_divs:
            if _vmem_bytes(bb, rb, Wo) <= budget:
                if bb * rb > best_work:
                    best_bb, best_rb, best_work = bb, rb, bb * rb
                break
    bb, rb = best_bb, best_rb

    # Dual-TC chips: make the parallel grid >= num_cores steps and load-balanced.
    if num_cores > 1:
        for _ in range(16):
            steps = (-(-N // bb)) * (Ho // rb)
            if steps >= num_cores and steps % num_cores == 0:
                break
            if bb > 1:
                bb -= 1
            else:
                smaller = [d for d in row_divs if d < rb]
                if not smaller:
                    break
                rb = smaller[0]
    return bb, rb


# ----------------------------- wrapper ---------------------------------------


def convchain_forward(x_nchw, w_oihw, b, *, batch_block=None, row_block=None):
    N, C, H, W = x_nchw.shape
    assert C == CIN and H % 2 == 0 and W % 2 == 0
    Ho, Wo = H // 2, W // 2

    # ---- glue (layout plumbing, outside the kernel) -------------------------
    # bf16 cast happens FIRST so the pad / 9-slice concat / 6-D transpose all
    # move bf16 (exact: no arithmetic between here and the old cast point).
    x = jnp.transpose(x_nchw, (0, 2, 3, 1)).astype(jnp.bfloat16)       # NHWC bf16
    xp = jnp.pad(x, ((0, 0), (1, 1), (1, 1), (0, 0)))
    cols = [xp[:, ky:ky + H, kx:kx + W, :] for ky in range(KH) for kx in range(KW)]
    patches = jnp.concatenate(cols, axis=-1)                           # (N, H, W, 27)

    # Reorder rows to (i, p, q, j) so the in-kernel pool is leading-dim only
    # and the Ho grid axis slices contiguous row chunks.
    p6 = patches.reshape(N, Ho, 2, Wo, 2, K_TAPS)                      # h=(i,p), w=(j,q)
    p6 = jnp.transpose(p6, (0, 1, 2, 4, 3, 5))                         # (N,Ho,p,q,Wo,27)
    xcol = p6.reshape(N, H * W, K_TAPS)                                # bf16

    w2 = jnp.transpose(w_oihw, (2, 3, 1, 0)).reshape(K_TAPS, COUT).astype(jnp.bfloat16)
    b2 = b.reshape(1, COUT).astype(jnp.float32)

    # ---- VMEM- and core-count-aware blocking --------------------------------
    num_cores = _num_tensorcores()
    vmem_cap = _vmem_capacity_bytes()
    budget = min(vmem_cap // 8, 24 << 20)
    bb, rb = _choose_blocks(N, Ho, Wo, budget, num_cores)
    if batch_block is not None:
        bb = int(batch_block)
    if row_block is not None:
        assert Ho % row_block == 0
        rb = int(row_block)

    nb = pl.cdiv(N, bb)
    nr = Ho // rb
    Np = nb * bb
    if Np != N:
        xcol = jnp.pad(xcol, ((0, Np - N), (0, 0), (0, 0)))

    need = _vmem_bytes(bb, rb, Wo)
    vmem_limit = int(min(vmem_cap // 2, max(4 * need, 32 << 20)))

    flops = 2 * Np * H * W * K_TAPS * COUT
    bytes_accessed = (xcol.size * 2 + w2.size * 2 + b2.size * 4
                      + Np * Ho * Wo * COUT * 4)

    out = pl.pallas_call(
        convchain_kernel,
        out_shape=jax.ShapeDtypeStruct((Np, Ho, Wo, COUT), jnp.float32),
        grid_spec=pltpu.PrefetchScalarGridSpec(
            num_scalar_prefetch=0,
            grid=(nb, nr),
            in_specs=[
                pl.BlockSpec((bb, rb * 4 * Wo, K_TAPS), lambda n, r: (n, r, 0)),
                pl.BlockSpec((K_TAPS, COUT), lambda n, r: (0, 0)),
                pl.BlockSpec((1, COUT), lambda n, r: (0, 0)),
            ],
            out_specs=pl.BlockSpec((bb, rb, Wo, COUT), lambda n, r: (n, r, 0, 0)),
        ),
        compiler_params=pltpu.CompilerParams(
            dimension_semantics=("parallel", "parallel"),
            vmem_limit_bytes=vmem_limit),
        cost_estimate=pl.CostEstimate(flops=flops, transcendentals=0,
                                      bytes_accessed=bytes_accessed),
    )(xcol, w2, b2)

    # glue: drop batch padding, NHWC -> NCHW to match the PyTorch module.
    # TODO(synk): fold this transpose into the kernel via a lane-dense NCHW
    # out_spec once the in-kernel (pix, COUT)->(COUT, pix) transpose is validated.
    out = out[:N]
    return jnp.transpose(out, (0, 3, 1, 2))


# ----------------------------- reference -------------------------------------


def reference_forward(x_nchw, w_oihw, b):
    y = lax.conv_general_dilated(
        x_nchw, w_oihw, window_strides=(1, 1), padding=((1, 1), (1, 1)),
        dimension_numbers=("NCHW", "OIHW", "NCHW"),
        precision=lax.Precision.HIGHEST)
    y = y + b[None, :, None, None]
    y = jnp.maximum(y, 0.0)
    y = lax.reduce_window(y, -jnp.inf, lax.max,
                          window_dimensions=(1, 1, 2, 2),
                          window_strides=(1, 1, 2, 2), padding="VALID")
    return y


if __name__ == "__main__":
    key = jax.random.PRNGKey(0)
    kx, kw, kb = jax.random.split(key, 3)

    N, H, W = 2, 16, 16
    x = jax.random.normal(kx, (N, CIN, H, W), dtype=jnp.float32)

    # PyTorch-conv-like uniform(-1/sqrt(fan_in), +1/sqrt(fan_in)) init.
    bound = 1.0 / np.sqrt(CIN * KH * KW)
    w = jax.random.uniform(kw, (COUT, CIN, KH, KW), jnp.float32, -bound, bound)
    b = jax.random.uniform(kb, (COUT,), jnp.float32, -bound, bound)

    out = jax.block_until_ready(convchain_forward(x, w, b))
    assert out.shape == (N, COUT, H // 2, W // 2), out.shape

    # Reference uses the same bf16-rounded matmul inputs the kernel feeds the
    # MXU (f32 accumulation both sides), so the comparison stays tight.
    xq = x.astype(jnp.bfloat16).astype(jnp.float32)
    wq = w.astype(jnp.bfloat16).astype(jnp.float32)
    ref = reference_forward(xq, wq, b)
    err = float(np.max(np.abs(np.asarray(out) - np.asarray(ref))))
    assert np.allclose(np.asarray(out), np.asarray(ref), rtol=1e-3, atol=1e-3), err
    print("KERNEL_OK")
</pallas_src>

<mosaic_0001>
module attributes {stable_mosaic.version = 11 : i64} {
  func.func @convchain_kernel(%arg0: i32, %arg1: i32, %arg2: memref<2x256x27xbf16, #tpu.memory_space<vmem>>, %arg3: memref<27x64xbf16, #tpu.memory_space<vmem>>, %arg4: memref<1x64xf32, #tpu.memory_space<vmem>>, %arg5: memref<2x8x8x64xf32, #tpu.memory_space<vmem>>) attributes {dimension_semantics = [#tpu.dimension_semantics<parallel>, #tpu.dimension_semantics<parallel>], iteration_bounds = array<i64: 1, 1>, scalar_prefetch = 0 : i64, scratch_operands = 0 : i64, tpu.core_type = #tpu.core_type<tc>, window_params = [{transform_indices = @transform_0, window_bounds = array<i64: 2, 256, 27>}, {pipeline_mode = #tpu.pipeline_mode<synchronous>, transform_indices = @transform_1, window_bounds = array<i64: 27, 64>}, {pipeline_mode = #tpu.pipeline_mode<synchronous>, transform_indices = @transform_2, window_bounds = array<i64: 1, 64>}, {transform_indices = @transform_3, window_bounds = array<i64: 2, 8, 8, 64>}]} {
    %c0 = arith.constant 0 : index
    %c0_0 = arith.constant 0 : index
    %c0_1 = arith.constant 0 : index
    %0 = vector.load %arg2[%c0, %c0_0, %c0_1] : memref<2x256x27xbf16, #tpu.memory_space<vmem>>, vector<2x256x27xbf16>
    %1 = vector.shape_cast %0 : vector<2x256x27xbf16> to vector<512x27xbf16>
    %c0_2 = arith.constant 0 : index
    %c0_3 = arith.constant 0 : index
    %2 = vector.load %arg3[%c0_2, %c0_3] : memref<27x64xbf16, #tpu.memory_space<vmem>>, vector<27x64xbf16>
    %cst = arith.constant dense<0.000000e+00> : vector<512x64xf32>
    %3 = tpu.matmul %1, %2, %cst {dimension_numbers = #tpu.dot_dimension_numbers<[1], [0], [0], [1], [0, 0, 1, 1], [], []>} : vector<512x27xbf16>, vector<27x64xbf16>, vector<512x64xf32> -> vector<512x64xf32>
    %4 = vector.shape_cast %3 : vector<512x64xf32> to vector<16x4x8x64xf32>
    %5 = vector.extract_strided_slice %4 {offsets = [0, 0, 0, 0], sizes = [16, 1, 8, 64], strides = [1, 1, 1, 1]} : vector<16x4x8x64xf32> to vector<16x1x8x64xf32>
    %6 = vector.shape_cast %5 : vector<16x1x8x64xf32> to vector<16x8x64xf32>
    %7 = vector.extract_strided_slice %4 {offsets = [0, 1, 0, 0], sizes = [16, 1, 8, 64], strides = [1, 1, 1, 1]} : vector<16x4x8x64xf32> to vector<16x1x8x64xf32>
    %8 = vector.shape_cast %7 : vector<16x1x8x64xf32> to vector<16x8x64xf32>
    %9 = arith.maximumf %6, %8 : vector<16x8x64xf32>
    %10 = vector.extract_strided_slice %4 {offsets = [0, 2, 0, 0], sizes = [16, 1, 8, 64], strides = [1, 1, 1, 1]} : vector<16x4x8x64xf32> to vector<16x1x8x64xf32>
    %11 = vector.shape_cast %10 : vector<16x1x8x64xf32> to vector<16x8x64xf32>
    %12 = vector.extract_strided_slice %4 {offsets = [0, 3, 0, 0], sizes = [16, 1, 8, 64], strides = [1, 1, 1, 1]} : vector<16x4x8x64xf32> to vector<16x1x8x64xf32>
    %13 = vector.shape_cast %12 : vector<16x1x8x64xf32> to vector<16x8x64xf32>
    %14 = arith.maximumf %11, %13 : vector<16x8x64xf32>
    %15 = arith.maximumf %9, %14 : vector<16x8x64xf32>
    %c0_4 = arith.constant 0 : index
    %c0_5 = arith.constant 0 : index
    %16 = vector.load %arg4[%c0_4, %c0_5] : memref<1x64xf32, #tpu.memory_space<vmem>>, vector<1x64xf32>
    %17 = vector.shape_cast %16 : vector<1x64xf32> to vector<1x1x64xf32>
    %18 = vector.broadcast %17 : vector<1x1x64xf32> to vector<16x8x64xf32>
    %19 = arith.addf %15, %18 : vector<16x8x64xf32>
    %cst_6 = arith.constant 0.000000e+00 : f32
    %20 = vector.broadcast %cst_6 : f32 to vector<16x8x64xf32>
    %21 = arith.maximumf %19, %20 : vector<16x8x64xf32>
    %22 = vector.shape_cast %21 : vector<16x8x64xf32> to vector<2x8x8x64xf32>
    %c0_7 = arith.constant 0 : index
    %c0_8 = arith.constant 0 : index
    %c0_9 = arith.constant 0 : index
    %c0_10 = arith.constant 0 : index
    %23 = vector.load %arg5[%c0_7, %c0_8, %c0_9, %c0_10] : memref<2x8x8x64xf32, #tpu.memory_space<vmem>>, vector<2x8x8x64xf32>
    tpu.vector_store %arg5[%c0_7, %c0_8, %c0_9, %c0_10], %22 {strides = array<i32>} : memref<2x8x8x64xf32, #tpu.memory_space<vmem>>, vector<2x8x8x64xf32>,
    return
  }
  func.func @transform_0(%arg0: i32, %arg1: i32) -> (i32, i32, i32) {
    %c0_i32 = arith.constant 0 : i32
    %c0_i32_0 = arith.constant 0 : i32
    return %arg0, %arg1, %c0_i32 : i32, i32, i32
  }
  func.func @transform_1(%arg0: i32, %arg1: i32) -> (i32, i32) {
    %c0_i32 = arith.constant 0 : i32
    %c0_i32_0 = arith.constant 0 : i32
    %c0_i32_1 = arith.constant 0 : i32
    return %c0_i32, %c0_i32_0 : i32, i32
  }
  func.func @transform_2(%arg0: i32, %arg1: i32) -> (i32, i32) {
    %c0_i32 = arith.constant 0 : i32
    %c0_i32_0 = arith.constant 0 : i32
    %c0_i32_1 = arith.constant 0 : i32
    return %c0_i32, %c0_i32_0 : i32, i32
  }
  func.func @transform_3(%arg0: i32, %arg1: i32) -> (i32, i32, i32, i32) {
    %c0_i32 = arith.constant 0 : i32
    %c0_i32_0 = arith.constant 0 : i32
    %c0_i32_1 = arith.constant 0 : i32
    return %arg0, %arg1, %c0_i32, %c0_i32_0 : i32, i32, i32, i32
  }
}

</mosaic_0001>

<llo_original>
// kernel: tpu_custom_call.1
$region0: #{tpu_custom_call.1}
  #allocation0 [shape = 'u32[]', space=smem, size = 0x4, offset = 0x4, fixed_abs, tag = 'smem constant byte address 0x4 - core index']
  #allocation1 [shape = 'u32[144,128]{1,0:T(1,128)}', space=vmem, size = 0x12000, scoped, tag = 'internal scratch']
  %s0 = inlined_call_operand.vmem [shape: bf16[2,256,27], index: 0, kind: input, shape index: {}]
  %s1 = inlined_call_operand.vmem [shape: bf16[27,64], index: 1, kind: input, shape index: {}]
  %s2 = inlined_call_operand.vmem [shape: f32[1,64], index: 2, kind: input, shape index: {}]
  %s3 = inlined_call_operand.hbm [shape: f32[2,8,8,64], index: 3, kind: output, shape index: {}]
  %s4 = sld [smem:[#allocation0]]
  $region22: #{tpu_custom_call.1} parent=0
    _
  %s6 = ssub.s32 1, %s4
  %s7 = scalar_select 0, %s6, %s4
  $region1: #{tpu_custom_call.1} parent=0
    #allocation2 [shape = 'u8[65536]{0}', space=vmem, size = 0x10000, scoped, tag = 'output window, operand 0, single buffered']
    #allocation3 [shape = 's32[1]{0}', space=sflag, size = 0x4, scoped, tag = 'scoped memory for tpu_custom_call.1']
    %8 = vsyncpa [#allocation3], 0
    // Predicated region
    $region2: #{tpu_custom_call.1} parent=1 // pred_check
      _
    $region3: #{tpu_custom_call.1} parent=1 // pred_check_branch
      %10 = sbr.rel (0) target = $region5
    $region4: #{tpu_custom_call.1} parent=1 // pred_region
      _
    $region5: #{tpu_custom_call.1} parent=1 // pred_fallthru
      _
    // Predicated region
    $region6: #{tpu_custom_call.1} parent=1 // pred_check
      _
    $region7: #{tpu_custom_call.1} parent=1 // pred_check_branch
      %12 = sbr.rel (0) target = $region9
    $region8: #{tpu_custom_call.1} parent=1 // pred_region
      _
    $region9: #{tpu_custom_call.1} parent=1 // pred_fallthru
      _
    // Predicated region
    $region10: #{tpu_custom_call.1} parent=1 // pred_check
      _
    $region11: #{tpu_custom_call.1} parent=1 // pred_check_branch
      %14 = sbr.rel (0) target = $region13
    $region12: #{tpu_custom_call.1} parent=1 // pred_region
      _
    $region13: #{tpu_custom_call.1} parent=1 // pred_fallthru
      _
    %v16 = vld [vmem:[%s0] sm:$0xf]
    %v17 = vld [vmem:[%s0 + $0x4] sm:$0xf]
    %v18 = vld [vmem:[%s0 + $0x8] sm:$0xf]
    %v19 = vld [vmem:[%s0 + $0xc] sm:$0xf]
    %v20 = vld [vmem:[%s0 + $0x10] sm:$0xf]
    %v21 = vld [vmem:[%s0 + $0x14] sm:$0xf]
    %v22 = vld [vmem:[%s0 + $0x18] sm:$0xf]
    %v23 = vld [vmem:[%s0 + $0x1c] sm:$0xf]
    %v24 = vld [vmem:[%s0 + $0x20] sm:$0xf]
    %v25 = vld [vmem:[%s0 + $0x24] sm:$0xf]
    %v26 = vld [vmem:[%s0 + $0x28] sm:$0xf]
    %v27 = vld [vmem:[%s0 + $0x2c] sm:$0xf]
    %v28 = vld [vmem:[%s0 + $0x30] sm:$0xf]
    %v29 = vld [vmem:[%s0 + $0x34] sm:$0xf]
    %v30 = vld [vmem:[%s0 + $0x38] sm:$0xf]
    %v31 = vld [vmem:[%s0 + $0x3c] sm:$0xf]
    %v32 = vld [vmem:[%s0 + $0x40] sm:$0xf]
    %v33 = vld [vmem:[%s0 + $0x44] sm:$0xf]
    %v34 = vld [vmem:[%s0 + $0x48] sm:$0xf]
    %v35 = vld [vmem:[%s0 + $0x4c] sm:$0xf]
    %v36 = vld [vmem:[%s0 + $0x50] sm:$0xf]
    %v37 = vld [vmem:[%s0 + $0x54] sm:$0xf]
    %v38 = vld [vmem:[%s0 + $0x58] sm:$0xf]
    %v39 = vld [vmem:[%s0 + $0x5c] sm:$0xf]
    %v40 = vld [vmem:[%s0 + $0x60] sm:$0xf]
    %v41 = vld [vmem:[%s0 + $0x64] sm:$0xf]
    %v42 = vld [vmem:[%s0 + $0x68] sm:$0xf]
    %v43 = vld [vmem:[%s0 + $0x6c] sm:$0xf]
    %v44 = vld [vmem:[%s0 + $0x70] sm:$0xf]
    %v45 = vld [vmem:[%s0 + $0x74] sm:$0xf]
    %v46 = vld [vmem:[%s0 + $0x78] sm:$0xf]
    %v47 = vld [vmem:[%s0 + $0x7c] sm:$0xf]
    %v48 = vld [vmem:[%s0 + $0x80] sm:$0xf]
    %v49 = vld [vmem:[%s0 + $0x84] sm:$0xf]
    %v50 = vld [vmem:[%s0 + $0x88] sm:$0xf]
    %v51 = vld [vmem:[%s0 + $0x8c] sm:$0xf]
    %v52 = vld [vmem:[%s0 + $0x90] sm:$0xf]
    %v53 = vld [vmem:[%s0 + $0x94] sm:$0xf]
    %v54 = vld [vmem:[%s0 + $0x98] sm:$0xf]
    %v55 = vld [vmem:[%s0 + $0x9c] sm:$0xf]
    %v56 = vld [vmem:[%s0 + $0xa0] sm:$0xf]
    %v57 = vld [vmem:[%s0 + $0xa4] sm:$0xf]
    %v58 = vld [vmem:[%s0 + $0xa8] sm:$0xf]
    %v59 = vld [vmem:[%s0 + $0xac] sm:$0xf]
    %v60 = vld [vmem:[%s0 + $0xb0] sm:$0xf]
    %v61 = vld [vmem:[%s0 + $0xb4] sm:$0xf]
    %v62 = vld [vmem:[%s0 + $0xb8] sm:$0xf]
    %v63 = vld [vmem:[%s0 + $0xbc] sm:$0xf]
    %v64 = vld [vmem:[%s0 + $0xc0] sm:$0xf]
    %v65 = vld [vmem:[%s0 + $0xc4] sm:$0xf]
    %v66 = vld [vmem:[%s0 + $0xc8] sm:$0xf]
    %v67 = vld [vmem:[%s0 + $0xcc] sm:$0xf]
    %v68 = vld [vmem:[%s0 + $0xd0] sm:$0xf]
    %v69 = vld [vmem:[%s0 + $0xd4] sm:$0xf]
    %v70 = vld [vmem:[%s0 + $0xd8] sm:$0xf]
    %v71 = vld [vmem:[%s0 + $0xdc] sm:$0xf]
    %v72 = vld [vmem:[%s0 + $0xe0] sm:$0xf]
    %v73 = vld [vmem:[%s0 + $0xe4] sm:$0xf]
    %v74 = vld [vmem:[%s0 + $0xe8] sm:$0xf]
    %v75 = vld [vmem:[%s0 + $0xec] sm:$0xf]
    %v76 = vld [vmem:[%s0 + $0xf0] sm:$0xf]
    %v77 = vld [vmem:[%s0 + $0xf4] sm:$0xf]
    %v78 = vld [vmem:[%s0 + $0xf8] sm:$0xf]
    %v79 = vld [vmem:[%s0 + $0xfc] sm:$0xf]
    %v80 = vld [vmem:[%s1] sm:$0xf]
    %v81 = vld [vmem:[%s1 + $0x4] sm:$0xf]
    %v82 = vld [vmem:[%s1 + $0x8] sm:$0xf]
    %v83 = vld [vmem:[%s1 + $0xc] sm:$0x3]
    %v148 = vunpack.c.l.b16 %v16
    %v149 = vunpack.c.l.b16 %v17
    %v150 = vunpack.c.l.b16 %v18
    %v151 = vunpack.c.l.b16 %v19
    %v152 = vunpack.c.l.b16 %v20
    %v153 = vunpack.c.l.b16 %v21
    %v154 = vunpack.c.l.b16 %v22
    %v155 = vunpack.c.l.b16 %v23
    %v156 = vunpack.c.l.b16 %v24
    %v157 = vunpack.c.l.b16 %v25
    %v158 = vunpack.c.l.b16 %v26
    %v159 = vunpack.c.l.b16 %v27
    %v160 = vunpack.c.l.b16 %v28
    %v161 = vunpack.c.l.b16 %v29
    %v162 = vunpack.c.l.b16 %v30
    %v163 = vunpack.c.l.b16 %v31
    %v164 = vunpack.c.l.b16 %v32
    %v165 = vunpack.c.l.b16 %v33
    %v166 = vunpack.c.l.b16 %v34
    %v167 = vunpack.c.l.b16 %v35
    %v168 = vunpack.c.l.b16 %v36
    %v169 = vunpack.c.l.b16 %v37
    %v170 = vunpack.c.l.b16 %v38
    %v171 = vunpack.c.l.b16 %v39
    %v172 = vunpack.c.l.b16 %v40
    %v173 = vunpack.c.l.b16 %v41
    %v174 = vunpack.c.l.b16 %v42
    %v175 = vunpack.c.l.b16 %v43
    %v176 = vunpack.c.l.b16 %v44
    %v177 = vunpack.c.l.b16 %v45
    %v178 = vunpack.c.l.b16 %v46
    %v179 = vunpack.c.l.b16 %v47
    %v180 = vunpack.c.l.b16 %v48
    %v181 = vunpack.c.l.b16 %v49
    %v182 = vunpack.c.l.b16 %v50
    %v183 = vunpack.c.l.b16 %v51
    %v184 = vunpack.c.l.b16 %v52
    %v185 = vunpack.c.l.b16 %v53
    %v186 = vunpack.c.l.b16 %v54
    %v187 = vunpack.c.l.b16 %v55
    %v188 = vunpack.c.l.b16 %v56
    %v189 = vunpack.c.l.b16 %v57
    %v190 = vunpack.c.l.b16 %v58
    %v191 = vunpack.c.l.b16 %v59
    %v192 = vunpack.c.l.b16 %v60
    %v193 = vunpack.c.l.b16 %v61
    %v194 = vunpack.c.l.b16 %v62
    %v195 = vunpack.c.l.b16 %v63
    %v196 = vunpack.c.l.b16 %v64
    %v197 = vunpack.c.l.b16 %v65
    %v198 = vunpack.c.l.b16 %v66
    %v199 = vunpack.c.l.b16 %v67
    %v200 = vunpack.c.l.b16 %v68
    %v201 = vunpack.c.l.b16 %v69
    %v202 = vunpack.c.l.b16 %v70
    %v203 = vunpack.c.l.b16 %v71
    %v204 = vunpack.c.l.b16 %v72
    %v205 = vunpack.c.l.b16 %v73
    %v206 = vunpack.c.l.b16 %v74
    %v207 = vunpack.c.l.b16 %v75
    %v208 = vunpack.c.l.b16 %v76
    %v209 = vunpack.c.l.b16 %v77
    %v210 = vunpack.c.l.b16 %v78
    %v211 = vunpack.c.l.b16 %v79
    %v212 = vpack.c.b16 %v149, %v148
    %v213 = vpack.c.b16 %v151, %v150
    %v214 = vpack.c.b16 %v153, %v152
    %v215 = vpack.c.b16 %v155, %v154
    %v216 = vpack.c.b16 %v157, %v156
    %v217 = vpack.c.b16 %v159, %v158
    %v218 = vpack.c.b16 %v161, %v160
    %v219 = vpack.c.b16 %v163, %v162
    %v220 = vpack.c.b16 %v165, %v164
    %v221 = vpack.c.b16 %v167, %v166
    %v222 = vpack.c.b16 %v169, %v168
    %v223 = vpack.c.b16 %v171, %v170
    %v224 = vpack.c.b16 %v173, %v172
    %v225 = vpack.c.b16 %v175, %v174
    %v226 = vpack.c.b16 %v177, %v176
    %v227 = vpack.c.b16 %v179, %v178
    %v228 = vpack.c.b16 %v181, %v180
    %v229 = vpack.c.b16 %v183, %v182
    %v230 = vpack.c.b16 %v185, %v184
    %v231 = vpack.c.b16 %v187, %v186
    %v232 = vpack.c.b16 %v189, %v188
    %v233 = vpack.c.b16 %v191, %v190
    %v234 = vpack.c.b16 %v193, %v192
    %v235 = vpack.c.b16 %v195, %v194
    %v236 = vpack.c.b16 %v197, %v196
    %v237 = vpack.c.b16 %v199, %v198
    %v238 = vpack.c.b16 %v201, %v200
    %v239 = vpack.c.b16 %v203, %v202
    %v240 = vpack.c.b16 %v205, %v204
    %v241 = vpack.c.b16 %v207, %v206
    %v242 = vpack.c.b16 %v209, %v208
    %v243 = vpack.c.b16 %v211, %v210
    %v248 = vunpack.c.l.b16 %v80
    %v249 = vunpack.c.l.b16 %v81
    %v250 = vunpack.c.l.b16 %v82
    %v251 = vunpack.c.l.b16 %v83
    %v252 = vpack.c.b16 %v249, %v248
    %v253 = vpack.c.b16 %v251, %v250
    %vm255 = vcmask 220160
    %v257 = vsel %vm255, %v212, 0
    %v260 = vsel %vm255, %v213, 0
    %v263 = vsel %vm255, %v214, 0
    %v266 = vsel %vm255, %v215, 0
    %v269 = vsel %vm255, %v216, 0
    %v272 = vsel %vm255, %v217, 0
    %v275 = vsel %vm255, %v218, 0
    %v278 = vsel %vm255, %v219, 0
    %v281 = vsel %vm255, %v220, 0
    %v284 = vsel %vm255, %v221, 0
    %v287 = vsel %vm255, %v222, 0
    %v290 = vsel %vm255, %v223, 0
    %v293 = vsel %vm255, %v224, 0
    %v296 = vsel %vm255, %v225, 0
    %v299 = vsel %vm255, %v226, 0
    %v302 = vsel %vm255, %v227, 0
    %v305 = vsel %vm255, %v228, 0
    %v308 = vsel %vm255, %v229, 0
    %v311 = vsel %vm255, %v230, 0
    %v314 = vsel %vm255, %v231, 0
    %v317 = vsel %vm255, %v232, 0
    %v320 = vsel %vm255, %v233, 0
    %v323 = vsel %vm255, %v234, 0
    %v326 = vsel %vm255, %v235, 0
    %v329 = vsel %vm255, %v236, 0
    %v332 = vsel %vm255, %v237, 0
    %v335 = vsel %vm255, %v238, 0
    %v338 = vsel %vm255, %v239, 0
    %v341 = vsel %vm255, %v240, 0
    %v344 = vsel %vm255, %v241, 0
    %v347 = vsel %vm255, %v242, 0
    %v350 = vsel %vm255, %v243, 0
    %vm352 = vcmask 1044480
    %vm353 = vcmask 1045504
    %v354 = vsel %vm352, 4294967295, 65535
    %v355 = vsel %vm353, %v354, 0
    %v357 = vand.u32 %v253, %v355
    %359 = vmatprep.subr.bf16.mxu0 0
    %360 = vmatpush1.bf16.msra.mxu0 %v252
    %361 = vmatprep.subr.bf16.mxu0 0
    %362 = vmatpush1.bf16.msra.mxu0 %v357
    %363 = vmatprep.subr.bf16.mxu0 0
    %364 = vmatpush1.bf16.msra.mxu0 0
    %365 = vmatprep.subr.bf16.mxu0 0
    %366 = vmatpush1.bf16.msra.mxu0 0
    %367 = vmatprep.subr.bf16.mxu0 0
    %368 = vmatpush1.bf16.msra.mxu0 0
    %369 = vmatprep.subr.bf16.mxu0 0
    %370 = vmatpush1.bf16.msra.mxu0 0
    %371 = vmatprep.subr.bf16.mxu0 0
    %372 = vmatpush1.bf16.msra.mxu0 0
    %373 = vmatprep.subr.bf16.mxu0 0
    %374 = vmatpush1.bf16.msra.mxu0 0
    %375 = vmatprep.subr.bf16.mxu0 0
    %376 = vmatpush1.bf16.msra.mxu0 0
    %377 = vmatprep.subr.bf16.mxu0 0
    %378 = vmatpush1.bf16.msra.mxu0 0
    %379 = vmatprep.subr.bf16.mxu0 0
    %380 = vmatpush1.bf16.msra.mxu0 0
    %381 = vmatprep.subr.bf16.mxu0 0
    %382 = vmatpush1.bf16.msra.mxu0 0
    %383 = vmatprep.subr.bf16.mxu0 0
    %384 = vmatpush1.bf16.msra.mxu0 0
    %385 = vmatprep.subr.bf16.mxu0 0
    %386 = vmatpush1.bf16.msra.mxu0 0
    %387 = vmatprep.subr.bf16.mxu0 0
    %388 = vmatpush1.bf16.msra.mxu0 0
    %389 = vmatprep.subr.bf16.mxu0 0
    %390 = vmatpush1.bf16.msra.mxu0 0
    %391 = vmatprep.mubr.bf16.mxu0 0
    %392 = vmatmul.mubr.bf16.gmra.mrb[0].mxu0 %v257
    %v393 = vpop.f32.mrb[0].mxu0
    %v394 = vadd.f32 0.0, %v393
    %v395 = vpop.f32.mrb[0].mxu0
    %v396 = vpop.f32.mrb[0].mxu0
    %v397 = vadd.f32 0.0, %v396
    %v398 = vpop.f32.mrb[0].mxu0
    %399 = vmatprep.mubr.bf16.mxu0 0
    %400 = vmatmul.mubr.bf16.gmra.mrb[0].mxu0 %v260
    %v401 = vpop.f32.mrb[0].mxu0
    %v402 = vadd.f32 0.0, %v401
    %v403 = vpop.f32.mrb[0].mxu0
    %v404 = vpop.f32.mrb[0].mxu0
    %v405 = vadd.f32 0.0, %v404
    %v406 = vpop.f32.mrb[0].mxu0
    %407 = vmatprep.mubr.bf16.mxu0 0
    %408 = vmatmul.mubr.bf16.gmra.mrb[0].mxu0 %v263
    %v409 = vpop.f32.mrb[0].mxu0
    %v410 = vadd.f32 0.0, %v409
    %v411 = vpop.f32.mrb[0].mxu0
    %v412 = vpop.f32.mrb[0].mxu0
    %v413 = vadd.f32 0.0, %v412
    %v414 = vpop.f32.mrb[0].mxu0
    %415 = vmatprep.mubr.bf16.mxu0 0
    %416 = vmatmul.mubr.bf16.gmra.mrb[0].mxu0 %v266
    %v417 = vpop.f32.mrb[0].mxu0
    %v418 = vadd.f32 0.0, %v417
    %v419 = vpop.f32.mrb[0].mxu0
    %v420 = vpop.f32.mrb[0].mxu0
    %v421 = vadd.f32 0.0, %v420
    %v422 = vpop.f32.mrb[0].mxu0
    %423 = vmatprep.mubr.bf16.mxu0 0
    %424 = vmatmul.mubr.bf16.gmra.mrb[0].mxu0 %v269
    %v425 = vpop.f32.mrb[0].mxu0
    %v426 = vadd.f32 0.0, %v425
    %v427 = vpop.f32.mrb[0].mxu0
    %v428 = vpop.f32.mrb[0].mxu0
    %v429 = vadd.f32 0.0, %v428
    %v430 = vpop.f32.mrb[0].mxu0
    %431 = vmatprep.mubr.bf16.mxu0 0
    %432 = vmatmul.mubr.bf16.gmra.mrb[0].mxu0 %v272
    %v433 = vpop.f32.mrb[0].mxu0
    %v434 = vadd.f32 0.0, %v433
    %v435 = vpop.f32.mrb[0].mxu0
    %v436 = vpop.f32.mrb[0].mxu0
    %v437 = vadd.f32 0.0, %v436
    %v438 = vpop.f32.mrb[0].mxu0
    %439 = vmatprep.mubr.bf16.mxu0 0
    %440 = vmatmul.mubr.bf16.gmra.mrb[0].mxu0 %v275
    %v441 = vpop.f32.mrb[0].mxu0
    %v442 = vadd.f32 0.0, %v441
    %v443 = vpop.f32.mrb[0].mxu0
    %v444 = vpop.f32.mrb[0].mxu0
    %v445 = vadd.f32 0.0, %v444
    %v446 = vpop.f32.mrb[0].mxu0
    %447 = vmatprep.mubr.bf16.mxu0 0
    %448 = vmatmul.mubr.bf16.gmra.mrb[0].mxu0 %v278
    %v449 = vpop.f32.mrb[0].mxu0
    %v450 = vadd.f32 0.0, %v449
    %v451 = vpop.f32.mrb[0].mxu0
    %v452 = vpop.f32.mrb[0].mxu0
    %v453 = vadd.f32 0.0, %v452
    %v454 = vpop.f32.mrb[0].mxu0
    %455 = vmatprep.mubr.bf16.mxu0 0
    %456 = vmatmul.mubr.bf16.gmra.mrb[0].mxu0 %v281
    %v457 = vpop.f32.mrb[0].mxu0
    %v458 = vadd.f32 0.0, %v457
    %v459 = vpop.f32.mrb[0].mxu0
    %v460 = vpop.f32.mrb[0].mxu0
    %v461 = vadd.f32 0.0, %v460
    %v462 = vpop.f32.mrb[0].mxu0
    %463 = vmatprep.mubr.bf16.mxu0 0
    %464 = vmatmul.mubr.bf16.gmra.mrb[0].mxu0 %v284
    %v465 = vpop.f32.mrb[0].mxu0
    %v466 = vadd.f32 0.0, %v465
    %v467 = vpop.f32.mrb[0].mxu0
    %v468 = vpop.f32.mrb[0].mxu0
    %v469 = vadd.f32 0.0, %v468
    %v470 = vpop.f32.mrb[0].mxu0
    %471 = vmatprep.mubr.bf16.mxu0 0
    %472 = vmatmul.mubr.bf16.gmra.mrb[0].mxu0 %v287
    %v473 = vpop.f32.mrb[0].mxu0
    %v474 = vadd.f32 0.0, %v473
    %v475 = vpop.f32.mrb[0].mxu0
    %v476 = vpop.f32.mrb[0].mxu0
    %v477 = vadd.f32 0.0, %v476
    %v478 = vpop.f32.mrb[0].mxu0
    %479 = vmatprep.mubr.bf16.mxu0 0
    %480 = vmatmul.mubr.bf16.gmra.mrb[0].mxu0 %v290
    %v481 = vpop.f32.mrb[0].mxu0
    %v482 = vadd.f32 0.0, %v481
    %v483 = vpop.f32.mrb[0].mxu0
    %v484 = vpop.f32.mrb[0].mxu0
    %v485 = vadd.f32 0.0, %v484
    %v486 = vpop.f32.mrb[0].mxu0
    %487 = vmatprep.mubr.bf16.mxu0 0
    %488 = vmatmul.mubr.bf16.gmra.mrb[0].mxu0 %v293
    %v489 = vpop.f32.mrb[0].mxu0
    %v490 = vadd.f32 0.0, %v489
    %v491 = vpop.f32.mrb[0].mxu0
    %v492 = vpop.f32.mrb[0].mxu0
    %v493 = vadd.f32 0.0, %v492
    %v494 = vpop.f32.mrb[0].mxu0
    %495 = vmatprep.mubr.bf16.mxu0 0
    %496 = vmatmul.mubr.bf16.gmra.mrb[0].mxu0 %v296
    %v497 = vpop.f32.mrb[0].mxu0
    %v498 = vadd.f32 0.0, %v497
    %v499 = vpop.f32.mrb[0].mxu0
    %v500 = vpop.f32.mrb[0].mxu0
    %v501 = vadd.f32 0.0, %v500
    %v502 = vpop.f32.mrb[0].mxu0
    %503 = vmatprep.mubr.bf16.mxu0 0
    %504 = vmatmul.mubr.bf16.gmra.mrb[0].mxu0 %v299
    %v505 = vpop.f32.mrb[0].mxu0
    %v506 = vadd.f32 0.0, %v505
    %v507 = vpop.f32.mrb[0].mxu0
    %v508 = vpop.f32.mrb[0].mxu0
    %v509 = vadd.f32 0.0, %v508
    %v510 = vpop.f32.mrb[0].mxu0
    %511 = vmatprep.mubr.bf16.mxu0 0
    %512 = vmatmul.mubr.bf16.gmra.mrb[0].mxu0 %v302
    %v513 = vpop.f32.mrb[0].mxu0
    %v514 = vadd.f32 0.0, %v513
    %v515 = vpop.f32.mrb[0].mxu0
    %v516 = vpop.f32.mrb[0].mxu0
    %v517 = vadd.f32 0.0, %v516
    %v518 = vpop.f32.mrb[0].mxu0
    %519 = vmatprep.mubr.bf16.mxu0 0
    %520 = vmatmul.mubr.bf16.gmra.mrb[0].mxu0 %v305
    %v521 = vpop.f32.mrb[0].mxu0
    %v522 = vadd.f32 0.0, %v521
    %v523 = vpop.f32.mrb[0].mxu0
    %v524 = vpop.f32.mrb[0].mxu0
    %v525 = vadd.f32 0.0, %v524
    %v526 = vpop.f32.mrb[0].mxu0
    %527 = vmatprep.mubr.bf16.mxu0 0
    %528 = vmatmul.mubr.bf16.gmra.mrb[0].mxu0 %v308
    %v529 = vpop.f32.mrb[0].mxu0
    %v530 = vadd.f32 0.0, %v529
    %v531 = vpop.f32.mrb[0].mxu0
    %v532 = vpop.f32.mrb[0].mxu0
    %v533 = vadd.f32 0.0, %v532
    %v534 = vpop.f32.mrb[0].mxu0
    %535 = vmatprep.mubr.bf16.mxu0 0
    %536 = vmatmul.mubr.bf16.gmra.mrb[0].mxu0 %v311
    %v537 = vpop.f32.mrb[0].mxu0
    %v538 = vadd.f32 0.0, %v537
    %v539 = vpop.f32.mrb[0].mxu0
    %v540 = vpop.f32.mrb[0].mxu0
    %v541 = vadd.f32 0.0, %v540
    %v542 = vpop.f32.mrb[0].mxu0
    %543 = vmatprep.mubr.bf16.mxu0 0
    %544 = vmatmul.mubr.bf16.gmra.mrb[0].mxu0 %v314
    %v545 = vpop.f32.mrb[0].mxu0
    %v546 = vadd.f32 0.0, %v545
    %v547 = vpop.f32.mrb[0].mxu0
    %v548 = vpop.f32.mrb[0].mxu0
    %v549 = vadd.f32 0.0, %v548
    %v550 = vpop.f32.mrb[0].mxu0
    %551 = vmatprep.mubr.bf16.mxu0 0
    %552 = vmatmul.mubr.bf16.gmra.mrb[0].mxu0 %v317
    %v553 = vpop.f32.mrb[0].mxu0
    %v554 = vadd.f32 0.0, %v553
    %v555 = vpop.f32.mrb[0].mxu0
    %v556 = vpop.f32.mrb[0].mxu0
    %v557 = vadd.f32 0.0, %v556
    %v558 = vpop.f32.mrb[0].mxu0
    %559 = vmatprep.mubr.bf16.mxu0 0
    %560 = vmatmul.mubr.bf16.gmra.mrb[0].mxu0 %v320
    %v561 = vpop.f32.mrb[0].mxu0
    %v562 = vadd.f32 0.0, %v561
    %v563 = vpop.f32.mrb[0].mxu0
    %v564 = vpop.f32.mrb[0].mxu0
    %v565 = vadd.f32 0.0, %v564
    %v566 = vpop.f32.mrb[0].mxu0
    %567 = vmatprep.mubr.bf16.mxu0 0
    %568 = vmatmul.mubr.bf16.gmra.mrb[0].mxu0 %v323
    %v569 = vpop.f32.mrb[0].mxu0
    %v570 = vadd.f32 0.0, %v569
    %v571 = vpop.f32.mrb[0].mxu0
    %v572 = vpop.f32.mrb[0].mxu0
    %v573 = vadd.f32 0.0, %v572
    %v574 = vpop.f32.mrb[0].mxu0
    %575 = vmatprep.mubr.bf16.mxu0 0
    %576 = vmatmul.mubr.bf16.gmra.mrb[0].mxu0 %v326
    %v577 = vpop.f32.mrb[0].mxu0
    %v578 = vadd.f32 0.0, %v577
    %v579 = vpop.f32.mrb[0].mxu0
    %v580 = vpop.f32.mrb[0].mxu0
    %v581 = vadd.f32 0.0, %v580
    %v582 = vpop.f32.mrb[0].mxu0
    %583 = vmatprep.mubr.bf16.mxu0 0
    %584 = vmatmul.mubr.bf16.gmra.mrb[0].mxu0 %v329
    %v585 = vpop.f32.mrb[0].mxu0
    %v586 = vadd.f32 0.0, %v585
    %v587 = vpop.f32.mrb[0].mxu0
    %v588 = vpop.f32.mrb[0].mxu0
    %v589 = vadd.f32 0.0, %v588
    %v590 = vpop.f32.mrb[0].mxu0
    %591 = vmatprep.mubr.bf16.mxu0 0
    %592 = vmatmul.mubr.bf16.gmra.mrb[0].mxu0 %v332
    %v593 = vpop.f32.mrb[0].mxu0
    %v594 = vadd.f32 0.0, %v593
    %v595 = vpop.f32.mrb[0].mxu0
    %v596 = vpop.f32.mrb[0].mxu0
    %v597 = vadd.f32 0.0, %v596
    %v598 = vpop.f32.mrb[0].mxu0
    %599 = vmatprep.mubr.bf16.mxu0 0
    %600 = vmatmul.mubr.bf16.gmra.mrb[0].mxu0 %v335
    %v601 = vpop.f32.mrb[0].mxu0
    %v602 = vadd.f32 0.0, %v601
    %v603 = vpop.f32.mrb[0].mxu0
    %v604 = vpop.f32.mrb[0].mxu0
    %v605 = vadd.f32 0.0, %v604
    %v606 = vpop.f32.mrb[0].mxu0
    %607 = vmatprep.mubr.bf16.mxu0 0
    %608 = vmatmul.mubr.bf16.gmra.mrb[0].mxu0 %v338
    %v609 = vpop.f32.mrb[0].mxu0
    %v610 = vadd.f32 0.0, %v609
    %v611 = vpop.f32.mrb[0].mxu0
    %v612 = vpop.f32.mrb[0].mxu0
    %v613 = vadd.f32 0.0, %v612
    %v614 = vpop.f32.mrb[0].mxu0
    %615 = vmatprep.mubr.bf16.mxu0 0
    %616 = vmatmul.mubr.bf16.gmra.mrb[0].mxu0 %v341
    %v617 = vpop.f32.mrb[0].mxu0
    %v618 = vadd.f32 0.0, %v617
    %v619 = vpop.f32.mrb[0].mxu0
    %v620 = vpop.f32.mrb[0].mxu0
    %v621 = vadd.f32 0.0, %v620
    %v622 = vpop.f32.mrb[0].mxu0
    %623 = vmatprep.mubr.bf16.mxu0 0
    %624 = vmatmul.mubr.bf16.gmra.mrb[0].mxu0 %v344
    %v625 = vpop.f32.mrb[0].mxu0
    %v626 = vadd.f32 0.0, %v625
    %v627 = vpop.f32.mrb[0].mxu0
    %v628 = vpop.f32.mrb[0].mxu0
    %v629 = vadd.f32 0.0, %v628
    %v630 = vpop.f32.mrb[0].mxu0
    %631 = vmatprep.mubr.bf16.mxu0 0
    %632 = vmatmul.mubr.bf16.gmra.mrb[0].mxu0 %v347
    %v633 = vpop.f32.mrb[0].mxu0
    %v634 = vadd.f32 0.0, %v633
    %v635 = vpop.f32.mrb[0].mxu0
    %v636 = vpop.f32.mrb[0].mxu0
    %v637 = vadd.f32 0.0, %v636
    %v638 = vpop.f32.mrb[0].mxu0
    %639 = vmatprep.mubr.bf16.mxu0 0
    %640 = vmatmul.mubr.bf16.gmra.mrb[0].mxu0 %v350
    %v641 = vpop.f32.mrb[0].mxu0
    %v642 = vadd.f32 0.0, %v641
    %v643 = vpop.f32.mrb[0].mxu0
    %v644 = vpop.f32.mrb[0].mxu0
    %v645 = vadd.f32 0.0, %v644
    %v646 = vpop.f32.mrb[0].mxu0
    %647 = vdwg.mxu0
    %v648 = vmax.f32 %v394, %v397
    %v649 = vmax.f32 %v410, %v413
    %v650 = vmax.f32 %v426, %v429
    %v651 = vmax.f32 %v442, %v445
    %v652 = vmax.f32 %v458, %v461
    %v653 = vmax.f32 %v474, %v477
    %v654 = vmax.f32 %v490, %v493
    %v655 = vmax.f32 %v506, %v509
    %v656 = vmax.f32 %v522, %v525
    %v657 = vmax.f32 %v538, %v541
    %v658 = vmax.f32 %v554, %v557
    %v659 = vmax.f32 %v570, %v573
    %v660 = vmax.f32 %v586, %v589
    %v661 = vmax.f32 %v602, %v605
    %v662 = vmax.f32 %v618, %v621
    %v663 = vmax.f32 %v634, %v637
    %v664 = vmax.f32 %v402, %v405
    %v665 = vmax.f32 %v418, %v421
    %v666 = vmax.f32 %v434, %v437
    %v667 = vmax.f32 %v450, %v453
    %v668 = vmax.f32 %v466, %v469
    %v669 = vmax.f32 %v482, %v485
    %v670 = vmax.f32 %v498, %v501
    %v671 = vmax.f32 %v514, %v517
    %v672 = vmax.f32 %v530, %v533
    %v673 = vmax.f32 %v546, %v549
    %v674 = vmax.f32 %v562, %v565
    %v675 = vmax.f32 %v578, %v581
    %v676 = vmax.f32 %v594, %v597
    %v677 = vmax.f32 %v610, %v613
    %v678 = vmax.f32 %v626, %v629
    %v679 = vmax.f32 %v642, %v645
    %v680 = vmax.f32 %v648, %v664
    %v681 = vmax.f32 %v649, %v665
    %v682 = vmax.f32 %v650, %v666
    %v683 = vmax.f32 %v651, %v667
    %v684 = vmax.f32 %v652, %v668
    %v685 = vmax.f32 %v653, %v669
    %v686 = vmax.f32 %v654, %v670
    %v687 = vmax.f32 %v655, %v671
    %v688 = vmax.f32 %v656, %v672
    %v689 = vmax.f32 %v657, %v673
    %v690 = vmax.f32 %v658, %v674
    %v691 = vmax.f32 %v659, %v675
    %v692 = vmax.f32 %v660, %v676
    %v693 = vmax.f32 %v661, %v677
    %v694 = vmax.f32 %v662, %v678
    %v695 = vmax.f32 %v663, %v679
    %v696 = vld [vmem:[%s2] sm:$0x1]
    %v698 = vlaneseq
    %v699 = vshrl.u32 %v698, 7
    %v700 = vsub.s32 0, %v699
    %v701 = vrot.slane %v696, %v700
    %v703 = vadd.f32 %v680, %v701
    %v704 = vadd.f32 %v681, %v701
    %v705 = vadd.f32 %v682, %v701
    %v706 = vadd.f32 %v683, %v701
    %v707 = vadd.f32 %v684, %v701
    %v708 = vadd.f32 %v685, %v701
    %v709 = vadd.f32 %v686, %v701
    %v710 = vadd.f32 %v687, %v701
    %v711 = vadd.f32 %v688, %v701
    %v712 = vadd.f32 %v689, %v701
    %v713 = vadd.f32 %v690, %v701
    %v714 = vadd.f32 %v691, %v701
    %v715 = vadd.f32 %v692, %v701
    %v716 = vadd.f32 %v693, %v701
    %v717 = vadd.f32 %v694, %v701
    %v718 = vadd.f32 %v695, %v701
    %v719 = vmax.f32 %v703, 0.0
    %v720 = vmax.f32 %v704, 0.0
    %v721 = vmax.f32 %v705, 0.0
    %v722 = vmax.f32 %v706, 0.0
    %v723 = vmax.f32 %v707, 0.0
    %v724 = vmax.f32 %v708, 0.0
    %v725 = vmax.f32 %v709, 0.0
    %v726 = vmax.f32 %v710, 0.0
    %v727 = vmax.f32 %v711, 0.0
    %v728 = vmax.f32 %v712, 0.0
    %v729 = vmax.f32 %v713, 0.0
    %v730 = vmax.f32 %v714, 0.0
    %v731 = vmax.f32 %v715, 0.0
    %v732 = vmax.f32 %v716, 0.0
    %v733 = vmax.f32 %v717, 0.0
    %v734 = vmax.f32 %v718, 0.0
    %vm735 = vcmask 523264
    %736 = vst.msk [vmem:[#allocation2] sm:$0xff] %vm735, %v719
    %737 = vst.msk [vmem:[#allocation2 + $0x8] sm:$0xff] %vm735, %v720
    %738 = vst.msk [vmem:[#allocation2 + $0x10] sm:$0xff] %vm735, %v721
    %739 = vst.msk [vmem:[#allocation2 + $0x18] sm:$0xff] %vm735, %v722
    %740 = vst.msk [vmem:[#allocation2 + $0x20] sm:$0xff] %vm735, %v723
    %741 = vst.msk [vmem:[#allocation2 + $0x28] sm:$0xff] %vm735, %v724
    %742 = vst.msk [vmem:[#allocation2 + $0x30] sm:$0xff] %vm735, %v725
    %743 = vst.msk [vmem:[#allocation2 + $0x38] sm:$0xff] %vm735, %v726
    %744 = vst.msk [vmem:[#allocation2 + $0x40] sm:$0xff] %vm735, %v727
    %745 = vst.msk [vmem:[#allocation2 + $0x48] sm:$0xff] %vm735, %v728
    %746 = vst.msk [vmem:[#allocation2 + $0x50] sm:$0xff] %vm735, %v729
    %747 = vst.msk [vmem:[#allocation2 + $0x58] sm:$0xff] %vm735, %v730
    %748 = vst.msk [vmem:[#allocation2 + $0x60] sm:$0xff] %vm735, %v731
    %749 = vst.msk [vmem:[#allocation2 + $0x68] sm:$0xff] %vm735, %v732
    %750 = vst.msk [vmem:[#allocation2 + $0x70] sm:$0xff] %vm735, %v733
    %751 = vst.msk [vmem:[#allocation2 + $0x78] sm:$0xff] %vm735, %v734
    // Predicated region
    $region14: #{tpu_custom_call.1} parent=1 // pred_check
      _
    $region15: #{tpu_custom_call.1} parent=1 // pred_check_branch
      %753 = sbr.rel (0) target = $region17
    $region16: #{tpu_custom_call.1} parent=1 // pred_region
      %s755 = ssub.s32 2048, 2048
      %756 = vsyncadd [#allocation3], %s755
      %s757 = sshll.u32 [#allocation2], 4
      %s758 = int_to_ptr.vmem [resolvable:$true] %s757
      %763 = dma.vmem_to_hbm [thread:$0]  %s758, 2048, %s3, [#allocation3], 128, 128, 8
    $region17: #{tpu_custom_call.1} parent=1 // pred_fallthru
      _
    // Predicated region
    $region18: #{tpu_custom_call.1} parent=1 // pred_check
      _
    $region19: #{tpu_custom_call.1} parent=1 // pred_check_branch
      %765 = sbr.rel (0) target = $region21
    $region20: #{tpu_custom_call.1} parent=1 // pred_region
      %766 = dma.done [#allocation3], 2048
    $region21: #{tpu_custom_call.1} parent=1 // pred_fallthru
      _
    %767 = vsyncpa [#allocation3], 1

</llo_original>
